<compile_context>
chip_gen: v5e
topology: v5e:2x2
jax: 0.10.0
libtpu: 0.0.40
codegen_flags: <defaults>
</compile_context>

<pallas_src>
import functools

import jax
import jax.numpy as jnp
from jax import lax
from jax.experimental import pallas as pl
from jax.experimental.pallas import tpu as pltpu


# --------------------------------------------------------------------------- #
# Kernel: one fused MXU matmul + folded-BN bias + ReLU, lane-dense store.
# --------------------------------------------------------------------------- #
def _conv_bn_relu_kernel(x_ref, w_ref, b_ref, o_ref):
    """Fused conv-as-matmul + BN bias + ReLU.

    x_ref : (1, M, K)        im2col rows, K = Cin*KH*Wp   (compute dtype)
    w_ref : (K, Wo*Cout)     banded, block-diagonal, BN-scale-folded weight
    b_ref : (1, Wo*Cout)     folded bias (f32)
    o_ref : (1, M, Wo*Cout)  lane-dense output
    """
    acc = jnp.dot(x_ref[0], w_ref[...], preferred_element_type=jnp.float32)
    o_ref[0] = jnp.maximum(acc + b_ref[...], 0.0).astype(o_ref.dtype)


# --------------------------------------------------------------------------- #
# Init-time preprocessing (run ONCE; not part of the per-call hot path).
# --------------------------------------------------------------------------- #
def prepare_conv_bn_ac(weight, conv_bias, gamma, beta, running_mean,
                       running_var, *, groups, height, width, padding=1,
                       stride=1, eps=1e-5, compute_dtype=jnp.bfloat16):
    """Fold BN(eval)+conv-bias into the weights and pre-build the banded,
    block-diagonal conv-as-matmul weight.  Returns (params, geom)."""
    assert stride == 1, "only stride=1 (the module default) is implemented"
    Cout, Cin_g, KH, KW = weight.shape
    G = groups
    Cin = Cin_g * G
    Cout_g = Cout // G
    assert Cout % G == 0

    Hp, Wp = height + 2 * padding, width + 2 * padding
    Ho, Wo = Hp - KH + 1, Wp - KW + 1

    f32 = jnp.float32
    # ---- fold BN (eval) + conv bias into per-channel scale / bias ------------
    inv_std = lax.rsqrt(running_var.astype(f32) + eps)
    scale = gamma.astype(f32) * inv_std                                  # (Cout,)
    b_fold = (conv_bias.astype(f32) - running_mean.astype(f32)) * scale \
        + beta.astype(f32)                                               # (Cout,)

    # ---- block-diagonal (ungrouped) weight, BN scale folded in ---------------
    w_full = jnp.zeros((Cout, Cin, KH, KW), f32)
    for g in range(G):
        w_full = w_full.at[g * Cout_g:(g + 1) * Cout_g,
                           g * Cin_g:(g + 1) * Cin_g].set(
            weight[g * Cout_g:(g + 1) * Cout_g].astype(f32))
    w_full = w_full * scale[:, None, None, None]

    # ---- banded "conv as matmul" weight, flattened contraction (ci,kh,wp) ----
    # w_flat[(ci*KH + kh)*Wp + wp, w*Cout + co] = w_full[co, ci, kh, wp - w]
    shift = jnp.stack([jnp.eye(Wp, Wo, k=-kw, dtype=f32) for kw in range(KW)],
                      axis=0)                                    # (KW, Wp, Wo)
    w_t = jnp.transpose(w_full, (1, 2, 3, 0))                    # (Cin,KH,KW,Cout)
    w_band = jnp.einsum('kpw,ihkc->ihpwc', shift, w_t)           # (Cin,KH,Wp,Wo,Cout)
    w_flat = w_band.reshape(Cin * KH * Wp, Wo * Cout).astype(compute_dtype)

    b_flat = jnp.tile(b_fold, (Wo,)).reshape(1, Wo * Cout)       # f32 epilogue

    params = dict(w_flat=w_flat, b_flat=b_flat)
    geom = dict(Cin=Cin, Cout=Cout, KH=KH, KW=KW, H=height, W=width,
                Hp=Hp, Wp=Wp, Ho=Ho, Wo=Wo, padding=padding,
                compute_dtype=compute_dtype)
    return params, geom


def _default_fold_batch():
    """v7x has 2 TensorCores/chip: keep grid=(N,) 'parallel' so each core gets
    one image.  On 1-TC chips (v5e/v6e) fold the batch into the matmul M so
    there is a single grid step (and twice the MXU row fill)."""
    try:
        kind = jax.devices()[0].device_kind.lower()
    except Exception:
        return True
    return not any(tag in kind for tag in ("v7", "7x"))


# --------------------------------------------------------------------------- #
# Per-call forward (hot path): pad + im2col stack + ONE pallas matmul kernel.
# --------------------------------------------------------------------------- #
def conv_bn_ac_forward(params, x_nchw, *, geom, fold_batch):
    N, Cin, H, W = x_nchw.shape
    assert Cin == geom["Cin"] and H == geom["H"] and W == geom["W"]
    KH, Wp, Ho, Wo = geom["KH"], geom["Wp"], geom["Ho"], geom["Wo"]
    Cout, P, cdt = geom["Cout"], geom["padding"], geom["compute_dtype"]
    K = Cin * KH * Wp
    lanes = Wo * Cout                       # 128 here -> unmasked vst

    # im2col LHS: lhs[n, h, (ci*KH + kh)*Wp + wp] = xp[n, ci, h+kh, wp]
    xp = jnp.pad(x_nchw.astype(cdt),
                 ((0, 0), (0, 0), (P, P), (P, P)))               # (N,Cin,Hp,Wp)
    bands = jnp.stack([xp[:, :, kh:kh + Ho, :] for kh in range(KH)],
                      axis=2)                                    # (N,Cin,KH,Ho,Wp)
    lhs = jnp.transpose(bands, (0, 3, 1, 2, 4)).reshape(N, Ho, K)

    if fold_batch:                          # v5e / v6e: single grid step
        lhs = lhs.reshape(1, N * Ho, K)
        num_blocks, m_blk = 1, N * Ho
        dim_sem = ("arbitrary",)
    else:                                   # v7x: one image per TensorCore
        num_blocks, m_blk = N, Ho
        dim_sem = ("parallel",)

    w_flat, b_flat = params["w_flat"], params["b_flat"]
    cost = pl.CostEstimate(
        flops=2 * N * Ho * K * lanes,
        transcendentals=0,
        bytes_accessed=(N * Ho * K * jnp.dtype(cdt).itemsize
                        + w_flat.size * jnp.dtype(cdt).itemsize
                        + b_flat.size * 4
                        + N * Ho * lanes * x_nchw.dtype.itemsize),
    )

    out_flat = pl.pallas_call(
        _conv_bn_relu_kernel,
        out_shape=jax.ShapeDtypeStruct((num_blocks, m_blk, lanes), x_nchw.dtype),
        grid_spec=pltpu.PrefetchScalarGridSpec(
            num_scalar_prefetch=0,
            grid=(num_blocks,),
            in_specs=[
                pl.BlockSpec((1, m_blk, K), lambda n: (n, 0, 0)),
                # Constant index_map + single buffer: weights / bias stay
                # VMEM-resident, no second pipeline buffer allocated.
                pl.BlockSpec((K, lanes), lambda n: (0, 0),
                             pipeline_mode=pl.Buffered(1)),
                pl.BlockSpec((1, lanes), lambda n: (0, 0),
                             pipeline_mode=pl.Buffered(1)),
            ],
            out_specs=pl.BlockSpec((1, m_blk, lanes), lambda n: (n, 0, 0)),
        ),
        compiler_params=pltpu.CompilerParams(dimension_semantics=dim_sem),
        cost_estimate=cost,
    )(lhs, w_flat, b_flat)

    # glue: unflatten lanes (free reshape) + one small NHWC->NCHW copy
    out = out_flat.reshape(N, Ho, Wo, Cout)
    return jnp.transpose(out, (0, 3, 1, 2))


# --------------------------------------------------------------------------- #
# Pure-JAX reference (PyTorch module semantics, BN in eval mode).
# --------------------------------------------------------------------------- #
def _reference(x, weight, conv_bias, gamma, beta, running_mean, running_var,
               *, groups, padding=1, eps=1e-5):
    y = lax.conv_general_dilated(
        x, weight, window_strides=(1, 1),
        padding=((padding, padding), (padding, padding)),
        dimension_numbers=("NCHW", "OIHW", "NCHW"),
        feature_group_count=groups)
    y = y + conv_bias[None, :, None, None]
    inv_std = 1.0 / jnp.sqrt(running_var + eps)
    y = (y - running_mean[None, :, None, None]) * (gamma * inv_std)[None, :, None, None]
    y = y + beta[None, :, None, None]
    return jnp.maximum(y, 0.0)


if __name__ == "__main__":
    # Module config: Conv_bn_ac(in_ch=4, out_ch=8, group=2), input NCHW.
    N, Cin, H, W = 2, 4, 16, 16
    Cout, G, K, P = 8, 2, 3, 1

    key = jax.random.PRNGKey(0)
    ks = jax.random.split(key, 7)
    x = jax.random.normal(ks[0], (N, Cin, H, W), jnp.float32)
    weight = 0.1 * jax.random.normal(ks[1], (Cout, Cin // G, K, K), jnp.float32)
    conv_bias = 0.1 * jax.random.normal(ks[2], (Cout,), jnp.float32)
    gamma = 1.0 + 0.1 * jax.random.normal(ks[3], (Cout,), jnp.float32)
    beta = 0.1 * jax.random.normal(ks[4], (Cout,), jnp.float32)
    running_mean = 0.1 * jax.random.normal(ks[5], (Cout,), jnp.float32)
    running_var = 0.5 + jnp.abs(jax.random.normal(ks[6], (Cout,), jnp.float32))

    ref = _reference(x, weight, conv_bias, gamma, beta, running_mean,
                     running_var, groups=G, padding=P)
    fold_batch = _default_fold_batch()

    # ---- default hot path: bf16 MXU operands, f32 accumulation/epilogue ------
    params_bf16, geom_bf16 = prepare_conv_bn_ac(
        weight, conv_bias, gamma, beta, running_mean, running_var,
        groups=G, height=H, width=W, padding=P, compute_dtype=jnp.bfloat16)
    fwd_bf16 = jax.jit(functools.partial(conv_bn_ac_forward, params_bf16,
                                         geom=geom_bf16, fold_batch=fold_batch))
    out_bf16 = jax.block_until_ready(fwd_bf16(x))
    assert out_bf16.shape == (N, Cout, H, W), out_bf16.shape
    assert jnp.allclose(out_bf16, ref, atol=3e-2, rtol=3e-2), (
        float(jnp.max(jnp.abs(out_bf16 - ref))))

    # ---- f32 path: tight tolerance, validates the index math exactly ---------
    params_f32, geom_f32 = prepare_conv_bn_ac(
        weight, conv_bias, gamma, beta, running_mean, running_var,
        groups=G, height=H, width=W, padding=P, compute_dtype=jnp.float32)
    fwd_f32 = jax.jit(functools.partial(conv_bn_ac_forward, params_f32,
                                        geom=geom_f32, fold_batch=fold_batch))
    out_f32 = jax.block_until_ready(fwd_f32(x))
    assert jnp.allclose(out_f32, ref, atol=1e-4, rtol=1e-4), (
        float(jnp.max(jnp.abs(out_f32 - ref))))

    print("KERNEL_OK")
</pallas_src>

<mosaic_0001>
module attributes {stable_mosaic.version = 11 : i64} {
  func.func @_conv_bn_relu_kernel(%arg0: i32, %arg1: memref<1x32x216xbf16, #tpu.memory_space<vmem>>, %arg2: memref<216x128xbf16, #tpu.memory_space<vmem>>, %arg3: memref<1x128xf32, #tpu.memory_space<vmem>>, %arg4: memref<1x32x128xf32, #tpu.memory_space<vmem>>) attributes {dimension_semantics = [#tpu.dimension_semantics<arbitrary>], iteration_bounds = array<i64: 1>, scalar_prefetch = 0 : i64, scratch_operands = 0 : i64, tpu.core_type = #tpu.core_type<tc>, window_params = [{transform_indices = @transform_0, window_bounds = array<i64: 1, 32, 216>}, {pipeline_mode = #tpu.pipeline_mode<synchronous>, transform_indices = @transform_1, window_bounds = array<i64: 216, 128>}, {pipeline_mode = #tpu.pipeline_mode<synchronous>, transform_indices = @transform_2, window_bounds = array<i64: 1, 128>}, {transform_indices = @transform_3, window_bounds = array<i64: 1, 32, 128>}]} {
    %c0 = arith.constant 0 : index
    %c0_0 = arith.constant 0 : index
    %c0_1 = arith.constant 0 : index
    %0 = vector.load %arg1[%c0, %c0_0, %c0_1] : memref<1x32x216xbf16, #tpu.memory_space<vmem>>, vector<1x32x216xbf16>
    %1 = vector.shape_cast %0 : vector<1x32x216xbf16> to vector<32x216xbf16>
    %c0_2 = arith.constant 0 : index
    %c0_3 = arith.constant 0 : index
    %2 = vector.load %arg2[%c0_2, %c0_3] : memref<216x128xbf16, #tpu.memory_space<vmem>>, vector<216x128xbf16>
    %cst = arith.constant dense<0.000000e+00> : vector<32x128xf32>
    %3 = tpu.matmul %1, %2, %cst {dimension_numbers = #tpu.dot_dimension_numbers<[1], [0], [0], [1], [0, 0, 1, 1], [], []>} : vector<32x216xbf16>, vector<216x128xbf16>, vector<32x128xf32> -> vector<32x128xf32>
    %c0_4 = arith.constant 0 : index
    %c0_5 = arith.constant 0 : index
    %4 = vector.load %arg3[%c0_4, %c0_5] : memref<1x128xf32, #tpu.memory_space<vmem>>, vector<1x128xf32>
    %5 = vector.broadcast %4 : vector<1x128xf32> to vector<32x128xf32>
    %6 = arith.addf %3, %5 : vector<32x128xf32>
    %cst_6 = arith.constant 0.000000e+00 : f32
    %7 = vector.broadcast %cst_6 : f32 to vector<32x128xf32>
    %8 = arith.maximumf %6, %7 : vector<32x128xf32>
    %c0_7 = arith.constant 0 : index
    %c0_8 = arith.constant 0 : index
    %c0_9 = arith.constant 0 : index
    %9 = vector.load %arg4[%c0_7, %c0_8, %c0_9] : memref<1x32x128xf32, #tpu.memory_space<vmem>>, vector<1x32x128xf32>
    %10 = vector.shape_cast %9 : vector<1x32x128xf32> to vector<32x128xf32>
    %11 = vector.shape_cast %8 : vector<32x128xf32> to vector<1x32x128xf32>
    tpu.vector_store %arg4[%c0_7, %c0_8, %c0_9], %11 {strides = array<i32>} : memref<1x32x128xf32, #tpu.memory_space<vmem>>, vector<1x32x128xf32>,
    return
  }
  func.func @transform_0(%arg0: i32) -> (i32, i32, i32) {
    %c0_i32 = arith.constant 0 : i32
    %c0_i32_0 = arith.constant 0 : i32
    %c0_i32_1 = arith.constant 0 : i32
    return %arg0, %c0_i32, %c0_i32_0 : i32, i32, i32
  }
  func.func @transform_1(%arg0: i32) -> (i32, i32) {
    %c0_i32 = arith.constant 0 : i32
    %c0_i32_0 = arith.constant 0 : i32
    %c0_i32_1 = arith.constant 0 : i32
    return %c0_i32, %c0_i32_0 : i32, i32
  }
  func.func @transform_2(%arg0: i32) -> (i32, i32) {
    %c0_i32 = arith.constant 0 : i32
    %c0_i32_0 = arith.constant 0 : i32
    %c0_i32_1 = arith.constant 0 : i32
    return %c0_i32, %c0_i32_0 : i32, i32
  }
  func.func @transform_3(%arg0: i32) -> (i32, i32, i32) {
    %c0_i32 = arith.constant 0 : i32
    %c0_i32_0 = arith.constant 0 : i32
    %c0_i32_1 = arith.constant 0 : i32
    return %arg0, %c0_i32, %c0_i32_0 : i32, i32, i32
  }
}

</mosaic_0001>

<llo_original>
// kernel: conv_bn_ac_forward.1
$region0: #{conv_bn_ac_forward.1}
  #allocation0 [shape = 'u32[]', space=smem, size = 0x4, offset = 0x4, fixed_abs, tag = 'smem constant byte address 0x4 - core index']
  #allocation1 [shape = 'u32[72,128]{1,0:T(1,128)}', space=vmem, size = 0x9000, scoped, tag = 'internal scratch']
  %s0 = inlined_call_operand.vmem [shape: bf16[1,32,216], index: 0, kind: input, shape index: {}]
  %s1 = inlined_call_operand.vmem [shape: bf16[216,128], index: 1, kind: input, shape index: {}]
  %s2 = inlined_call_operand.vmem [shape: f32[1,128], index: 2, kind: input, shape index: {}]
  %s3 = inlined_call_operand.vmem [shape: f32[1,32,128], index: 3, kind: output, shape index: {}]
  %s4 = sld [smem:[#allocation0]]
  $region22: #{conv_bn_ac_forward.1} parent=0
    _
  %s6 = ssub.s32 1, %s4
  %s7 = scalar_select 0, %s6, %s4
  // Predicated region
  $region2: #{conv_bn_ac_forward.1} parent=0 // pred_check
    _
  $region3: #{conv_bn_ac_forward.1} parent=0 // pred_check_branch
    %9 = sbr.rel (0) target = $region5
  $region4: #{conv_bn_ac_forward.1} parent=0 // pred_region
    _
  $region5: #{conv_bn_ac_forward.1} parent=0 // pred_fallthru
    _
  // Predicated region
  $region6: #{conv_bn_ac_forward.1} parent=0 // pred_check
    _
  $region7: #{conv_bn_ac_forward.1} parent=0 // pred_check_branch
    %11 = sbr.rel (0) target = $region9
  $region8: #{conv_bn_ac_forward.1} parent=0 // pred_region
    _
  $region9: #{conv_bn_ac_forward.1} parent=0 // pred_fallthru
    _
  // Predicated region
  $region10: #{conv_bn_ac_forward.1} parent=0 // pred_check
    _
  $region11: #{conv_bn_ac_forward.1} parent=0 // pred_check_branch
    %13 = sbr.rel (0) target = $region13
  $region12: #{conv_bn_ac_forward.1} parent=0 // pred_region
    _
  $region13: #{conv_bn_ac_forward.1} parent=0 // pred_fallthru
    _
  %v15 = vld [vmem:[%s0] sm:$0xff]
  %v16 = vld [vmem:[%s0 + $0x8] sm:$0xff]
  %v17 = vld [vmem:[%s0 + $0x10] sm:$0xff]
  %v18 = vld [vmem:[%s0 + $0x18] sm:$0xff]
  %v19 = vld [vmem:[%s1] sm:$0xf]
  %v20 = vld [vmem:[%s1 + $0x4] sm:$0xf]
  %v21 = vld [vmem:[%s1 + $0x8] sm:$0xf]
  %v22 = vld [vmem:[%s1 + $0xc] sm:$0xf]
  %v23 = vld [vmem:[%s1 + $0x10] sm:$0xf]
  %v24 = vld [vmem:[%s1 + $0x14] sm:$0xf]
  %v25 = vld [vmem:[%s1 + $0x18] sm:$0xf]
  %v26 = vld [vmem:[%s1 + $0x1c] sm:$0xf]
  %v27 = vld [vmem:[%s1 + $0x20] sm:$0xf]
  %v28 = vld [vmem:[%s1 + $0x24] sm:$0xf]
  %v29 = vld [vmem:[%s1 + $0x28] sm:$0xf]
  %v30 = vld [vmem:[%s1 + $0x2c] sm:$0xf]
  %v31 = vld [vmem:[%s1 + $0x30] sm:$0xf]
  %v32 = vld [vmem:[%s1 + $0x34] sm:$0xf]
  %v33 = vld [vmem:[%s1 + $0x38] sm:$0xf]
  %v34 = vld [vmem:[%s1 + $0x3c] sm:$0xf]
  %v35 = vld [vmem:[%s1 + $0x40] sm:$0xf]
  %v36 = vld [vmem:[%s1 + $0x44] sm:$0xf]
  %v37 = vld [vmem:[%s1 + $0x48] sm:$0xf]
  %v38 = vld [vmem:[%s1 + $0x4c] sm:$0xf]
  %v39 = vld [vmem:[%s1 + $0x50] sm:$0xf]
  %v40 = vld [vmem:[%s1 + $0x54] sm:$0xf]
  %v41 = vld [vmem:[%s1 + $0x58] sm:$0xf]
  %v42 = vld [vmem:[%s1 + $0x5c] sm:$0xf]
  %v43 = vld [vmem:[%s1 + $0x60] sm:$0xf]
  %v44 = vld [vmem:[%s1 + $0x64] sm:$0xf]
  %v45 = vld [vmem:[%s1 + $0x68] sm:$0xf]
  %v46 = vld [vmem:[%s2] sm:$0x1]
  %v48 = vperm.slane %v46, 0
  %v54 = vunpack.c.l.b16 %v15
  %v55 = vunpack.c.h.b16 %v15
  %v56 = vunpack.c.l.b16 %v16
  %v57 = vunpack.c.h.b16 %v16
  %v58 = vunpack.c.l.b16 %v17
  %v59 = vunpack.c.h.b16 %v17
  %v60 = vunpack.c.l.b16 %v18
  %v61 = vunpack.c.h.b16 %v18
  %v62 = vpack.c.b16 %v56, %v54
  %v63 = vpack.c.b16 %v57, %v55
  %v64 = vpack.c.b16 %v60, %v58
  %v65 = vpack.c.b16 %v61, %v59
  %v95 = vunpack.c.l.b16 %v19
  %v96 = vunpack.c.l.b16 %v20
  %v97 = vunpack.c.l.b16 %v21
  %v98 = vunpack.c.l.b16 %v22
  %v99 = vunpack.c.l.b16 %v23
  %v100 = vunpack.c.l.b16 %v24
  %v101 = vunpack.c.l.b16 %v25
  %v102 = vunpack.c.l.b16 %v26
  %v103 = vunpack.c.l.b16 %v27
  %v104 = vunpack.c.l.b16 %v28
  %v105 = vunpack.c.l.b16 %v29
  %v106 = vunpack.c.l.b16 %v30
  %v107 = vunpack.c.l.b16 %v31
  %v108 = vunpack.c.l.b16 %v32
  %v109 = vunpack.c.l.b16 %v33
  %v110 = vunpack.c.l.b16 %v34
  %v111 = vunpack.c.l.b16 %v35
  %v112 = vunpack.c.l.b16 %v36
  %v113 = vunpack.c.l.b16 %v37
  %v114 = vunpack.c.l.b16 %v38
  %v115 = vunpack.c.l.b16 %v39
  %v116 = vunpack.c.l.b16 %v40
  %v117 = vunpack.c.l.b16 %v41
  %v118 = vunpack.c.l.b16 %v42
  %v119 = vunpack.c.l.b16 %v43
  %v120 = vunpack.c.l.b16 %v44
  %v121 = vunpack.c.l.b16 %v45
  %v122 = vpack.c.b16 %v96, %v95
  %v123 = vpack.c.b16 %v98, %v97
  %v124 = vpack.c.b16 %v100, %v99
  %v125 = vpack.c.b16 %v102, %v101
  %v126 = vpack.c.b16 %v104, %v103
  %v127 = vpack.c.b16 %v106, %v105
  %v128 = vpack.c.b16 %v108, %v107
  %v129 = vpack.c.b16 %v110, %v109
  %v130 = vpack.c.b16 %v112, %v111
  %v131 = vpack.c.b16 %v114, %v113
  %v132 = vpack.c.b16 %v116, %v115
  %v133 = vpack.c.b16 %v118, %v117
  %v134 = vpack.c.b16 %v120, %v119
  %v135 = vpack.c.b16 %v121, %v121
  %vm149 = vcmask 719872
  %v151 = vsel %vm149, %v63, 0
  %v154 = vsel %vm149, %v65, 0
  %vm156 = vcmask 1043456
  %v158 = vsel %vm156, %v135, 0
  %160 = vmatpush.bf16.msra.mxu0 %v129
  %161 = vmatpush.bf16.msra.mxu0 %v128
  %162 = vmatpush.bf16.msra.mxu0 %v127
  %163 = vmatpush.bf16.msra.mxu0 %v126
  %164 = vmatpush.bf16.msra.mxu0 %v125
  %165 = vmatpush.bf16.msra.mxu0 %v124
  %166 = vmatpush.bf16.msra.mxu0 %v123
  %167 = vmatpush.bf16.msra.mxu0 %v122
  %168 = vmatmul.bf16.gmra.mxu0 %v62
  %v169 = vpop.f32.mrf.mxu0
  %v170 = vadd.f32 %v48, %v169
  %v171 = vpop.f32.mrf.mxu0
  %v172 = vadd.f32 %v48, %v171
  %173 = vmatmul.bf16.gmra.mxu0 %v64
  %v174 = vpop.f32.mrf.mxu0
  %v175 = vadd.f32 %v48, %v174
  %v176 = vpop.f32.mrf.mxu0
  %v177 = vadd.f32 %v48, %v176
  %178 = vdwg.mxu0
  %179 = vmatpush.bf16.msra.mxu0 0
  %180 = vmatpush.bf16.msra.mxu0 0
  %181 = vmatpush.bf16.msra.mxu0 %v158
  %182 = vmatpush.bf16.msra.mxu0 %v134
  %183 = vmatpush.bf16.msra.mxu0 %v133
  %184 = vmatpush.bf16.msra.mxu0 %v132
  %185 = vmatpush.bf16.msra.mxu0 %v131
  %186 = vmatpush.bf16.msra.mxu0 %v130
  %187 = vmatmul.bf16.gmra.mxu0 %v151
  %v188 = vpop.f32.mrf.mxu0
  %v189 = vadd.f32 %v170, %v188
  %v190 = vpop.f32.mrf.mxu0
  %v191 = vadd.f32 %v172, %v190
  %192 = vmatmul.bf16.gmra.mxu0 %v154
  %v193 = vpop.f32.mrf.mxu0
  %v194 = vadd.f32 %v175, %v193
  %v195 = vpop.f32.mrf.mxu0
  %v196 = vadd.f32 %v177, %v195
  %197 = vdwg.mxu0
  %v198 = vmax.f32 %v189, 0.0
  %v199 = vmax.f32 %v191, 0.0
  %v200 = vmax.f32 %v194, 0.0
  %v201 = vmax.f32 %v196, 0.0
  %202 = vst [vmem:[%s3] sm:$0xff] %v198
  %203 = vst [vmem:[%s3 + $0x8] sm:$0xff] %v199
  %204 = vst [vmem:[%s3 + $0x10] sm:$0xff] %v200
  %205 = vst [vmem:[%s3 + $0x18] sm:$0xff] %v201
  // Predicated region
  $region14: #{conv_bn_ac_forward.1} parent=0 // pred_check
    _
  $region15: #{conv_bn_ac_forward.1} parent=0 // pred_check_branch
    %207 = sbr.rel (0) target = $region17
  $region16: #{conv_bn_ac_forward.1} parent=0 // pred_region
    _
  $region17: #{conv_bn_ac_forward.1} parent=0 // pred_fallthru
    _
  // Predicated region
  $region18: #{conv_bn_ac_forward.1} parent=0 // pred_check
    _
  $region19: #{conv_bn_ac_forward.1} parent=0 // pred_check_branch
    %209 = sbr.rel (0) target = $region21
  $region20: #{conv_bn_ac_forward.1} parent=0 // pred_region
    _
  $region21: #{conv_bn_ac_forward.1} parent=0 // pred_fallthru
    _

</llo_original>
